<compile_context>
chip_gen: v7x
topology: tpu7x:2x2x1
jax: 0.10.0
libtpu: 0.0.40
codegen_flags: <defaults>
</compile_context>

<pallas_src>
import functools

import jax
import jax.numpy as jnp
from jax.experimental import pallas as pl
from jax.experimental.pallas import tpu as pltpu

NEG_INF = -1e30   # representable in bf16 (same exponent range as f32)


def pad_up(v, m):
    return ((v + m - 1) // m) * m


def _vmem_budget():
    """(vmem_limit_bytes, dst-tile working-set budget), generation aware."""
    vmem_cap = 128 * 1024 * 1024
    try:
        vmem_cap = int(pltpu.get_tpu_info().vmem_capacity_bytes)
    except Exception:
        pass
    if vmem_cap <= 64 * 1024 * 1024:                 # v7x-class: 64 MiB / TC
        return 40 * 1024 * 1024, 20 * 1024 * 1024
    return 48 * 1024 * 1024, 32 * 1024 * 1024        # v5e / v6e: 128 MiB


def pick_tile_dst(n_lane, heads, budget_bytes):
    """Dst-tile rows from the per-row VMEM working set.

    Per dst row: double-buffered bf16 ealpha tile (2 * H * N * 2 bytes) plus
    ~2 live f32 [H, T, N] temporaries (logits / exp).  The row capacity itself
    is the cap (previous version floored the quotient to a multiple of 128,
    collapsing it to 0); the tile is then picked from {128, 256, 512}.
    """
    per_row = heads * n_lane * (2 * 2 + 2 * 4)
    rows = budget_bytes // max(per_row, 1)
    tile = 128
    for cand in (256, 512):
        if rows >= cand and n_lane >= cand:
            tile = cand
    return tile


def pick_row_tile(n_rows):
    for cand in (512, 256, 128):
        if n_rows % cand == 0:
            return cand
    return 128


# ---------------------------------------------------------------------------
# Kernel 1: fused linear projection  h_cat = maybe_elu(x) @ W_cat  (row-tiled)
# ---------------------------------------------------------------------------
def project_kernel(x_ref, w_ref, o_ref, *, apply_elu):
    x = x_ref[...]
    if apply_elu:
        # ELU(alpha=1): x if x > 0 else exp(x) - 1  (f32, then cast for MXU)
        x = jnp.where(x > 0.0, x, jnp.expm1(x))
    o_ref[...] = jnp.dot(
        x.astype(jnp.bfloat16), w_ref[...],
        preferred_element_type=jnp.float32).astype(o_ref.dtype)


def project(x, w_cat_bf16, *, apply_elu, vmem_limit):
    n_rows, in_dim = x.shape
    f_out = w_cat_bf16.shape[1]
    tile = pick_row_tile(n_rows)
    kernel = functools.partial(project_kernel, apply_elu=apply_elu)
    grid_spec = pltpu.PrefetchScalarGridSpec(
        num_scalar_prefetch=0,
        grid=(n_rows // tile,),
        in_specs=[
            pl.BlockSpec((tile, in_dim), lambda i: (i, 0)),      # x row tile
            pl.BlockSpec((in_dim, f_out), lambda i: (0, 0)),     # W resident
        ],
        out_specs=pl.BlockSpec((tile, f_out), lambda i: (i, 0)),
    )
    return pl.pallas_call(
        kernel,
        out_shape=jax.ShapeDtypeStruct((n_rows, f_out), jnp.float32),
        grid_spec=grid_spec,
        compiler_params=pltpu.CompilerParams(
            dimension_semantics=("parallel",),
            vmem_limit_bytes=vmem_limit),
    )(x, w_cat_bf16)


# ---------------------------------------------------------------------------
# Kernel 2: dense attention + aggregation, gridded over dst tiles.
# ---------------------------------------------------------------------------
def gat_attn_kernel(ealpha_ref, adst_ref, h_ref, asrc_ref, bias_ref, o_ref,
                    *, heads, per_head, concat, out_pad):
    ealpha = ealpha_ref[...].astype(jnp.float32)   # [H, T, N] bf16 -> f32
    a_dst = adst_ref[...]                          # [H, T]  f32
    a_src = asrc_ref[...]                          # [H, N]  f32

    # logits[h, i, j] = a_dst[h, i] + a_src[h, j] + alpha_edge[h, i, j]
    logits = a_dst[:, :, None] + a_src[:, None, :] + ealpha
    logits = jnp.maximum(logits, 0.2 * logits)     # LeakyReLU(0.2)

    # Softmax over source nodes, per head, f32.  Non-edges (-1e30) underflow
    # to exactly 0 after the max-shift, so garbage in padded rows of h cannot
    # propagate (0 * finite == 0).  Normalization is deferred past the matmul.
    m = jnp.max(logits, axis=-1, keepdims=True)
    e = jnp.exp(logits - m)                        # [H, T, N] f32, <= 1
    s = jnp.sum(e, axis=-1, keepdims=True)         # [H, T, 1]
    inv_s = pl.reciprocal(s, approx=True)          # EUP slot
    e16 = e.astype(jnp.bfloat16)                   # MXU operand

    h = h_ref[...]                                 # [N, H*C] bf16
    head_outs = []
    for hd in range(heads):                        # small H: unrolled dots
        h_hd = h[:, hd * per_head:(hd + 1) * per_head]               # [N, C]
        o_hd = jnp.dot(e16[hd], h_hd, preferred_element_type=jnp.float32)
        head_outs.append(o_hd * inv_s[hd])         # scale [T, C], not [T, N]

    if concat:
        pieces = head_outs                         # -> [T, H*C]
    else:
        acc = head_outs[0]
        for t in head_outs[1:]:
            acc = acc + t
        pieces = [acc * (1.0 / heads)]             # mean over heads

    width = sum(p.shape[-1] for p in pieces)
    if width < out_pad:                            # lane-dense padded store
        pieces.append(jnp.zeros((pieces[0].shape[0], out_pad - width),
                                jnp.float32))
    out = jnp.concatenate(pieces, axis=-1) if len(pieces) > 1 else pieces[0]
    o_ref[...] = (out + bias_ref[...]).astype(o_ref.dtype)


def gat_attention(ealpha, a_dst_t, h, a_src_t, bias_pad, *, heads, per_head,
                  concat, out_pad, tile_dst, vmem_limit):
    n_dst, n_lane = ealpha.shape[1], ealpha.shape[2]
    hc = h.shape[1]
    n_tiles = n_dst // tile_dst
    kernel = functools.partial(gat_attn_kernel, heads=heads, per_head=per_head,
                               concat=concat, out_pad=out_pad)
    grid_spec = pltpu.PrefetchScalarGridSpec(
        num_scalar_prefetch=0,
        grid=(n_tiles,),
        in_specs=[
            pl.BlockSpec((heads, tile_dst, n_lane), lambda i: (0, i, 0)),  # ealpha bf16
            pl.BlockSpec((heads, tile_dst), lambda i: (0, i)),             # a_dst tile
            pl.BlockSpec((n_lane, hc), lambda i: (0, 0)),                  # h resident
            pl.BlockSpec((heads, n_lane), lambda i: (0, 0)),               # a_src resident
            pl.BlockSpec((1, out_pad), lambda i: (0, 0)),                  # bias resident
        ],
        out_specs=pl.BlockSpec((tile_dst, out_pad), lambda i: (i, 0)),
    )
    return pl.pallas_call(
        kernel,
        out_shape=jax.ShapeDtypeStruct((n_dst, out_pad), jnp.float32),
        grid_spec=grid_spec,
        compiler_params=pltpu.CompilerParams(
            dimension_semantics=("parallel",),
            vmem_limit_bytes=vmem_limit),
    )(ealpha, a_dst_t, h, a_src_t, bias_pad)


# ---------------------------------------------------------------------------
# Host glue: parameter derivation and dense edge-structure construction.
# ---------------------------------------------------------------------------
def block_att_matrix(att, heads, per_head):
    # att: [H, C] -> A: [H*C, H] with A[h*C + c, h] = att[h, c]
    return jnp.einsum('hc,hk->hck', att, jnp.eye(heads, dtype=att.dtype)
                      ).reshape(heads * per_head, heads)


def derive_layer_mats(w, att_src, att_dst, att_edge, w_edge, bias,
                      heads, per_head, fcat_pad, out_pad):
    a_src_blk = block_att_matrix(att_src, heads, per_head)   # [H*C, H]
    a_dst_blk = block_att_matrix(att_dst, heads, per_head)
    a_edge_blk = block_att_matrix(att_edge, heads, per_head)
    b_edge = w_edge @ a_edge_blk                             # [3, H]
    w_cat = jnp.concatenate([w, w @ a_src_blk, w @ a_dst_blk], axis=1)
    w_cat = jnp.pad(w_cat, ((0, 0), (0, fcat_pad - w_cat.shape[1])))
    bias_pad = jnp.pad(bias, (0, out_pad - bias.shape[0])).reshape(1, -1)
    return w_cat.astype(jnp.bfloat16), b_edge, bias_pad      # weights pre-cast


def build_edge_struct(edge_index, edge_attr, n_nodes):
    """Shared scatter indices and mean edge attrs (fill_value='mean')."""
    src, dst = edge_index[0], edge_index[1]
    e_dim = edge_attr.shape[1]
    n_edges = edge_attr.shape[0]
    sums = jnp.zeros((n_nodes, e_dim), jnp.float32).at[dst].add(edge_attr)
    counts = jnp.zeros((n_nodes,), jnp.float32).at[dst].add(
        jnp.ones((n_edges,), jnp.float32))
    mean_attr = sums / jnp.maximum(counts, 1.0)[:, None]
    return src, dst, mean_attr


def build_ealpha(src, dst, mean_attr, edge_attr, n_nodes, n_dst_pad,
                 n_lane_pad, b_edge):
    """Per-head dense edge logits (bf16) with non-edge mask folded in (-1e30).

    Self-loops use fill_value='mean' edge attrs.  Built per layer (lazily) so
    only one dense [H, N, N] tensor is live at a time.
    """
    heads = b_edge.shape[1]
    alpha_e = (edge_attr @ b_edge).astype(jnp.bfloat16)      # [E, H]
    alpha_self = (mean_attr @ b_edge).astype(jnp.bfloat16)   # [N, H]
    diag = jnp.arange(n_nodes)
    ealpha = jnp.full((heads, n_dst_pad, n_lane_pad), NEG_INF, jnp.bfloat16)
    ealpha = ealpha.at[:, dst, src].set(alpha_e.T)
    ealpha = ealpha.at[:, diag, diag].set(alpha_self.T)
    return ealpha


def init_gat_params(key, in_ch, hid_ch, out_ch, heads):
    ks = jax.random.split(key, 12)
    s = 0.1
    p = {}
    # conv1: GATConv(in, hid, heads, edge_dim=3), concat=True
    p['w1'] = s * jax.random.normal(ks[0], (in_ch, heads * hid_ch), jnp.float32)
    p['att_src1'] = s * jax.random.normal(ks[1], (heads, hid_ch), jnp.float32)
    p['att_dst1'] = s * jax.random.normal(ks[2], (heads, hid_ch), jnp.float32)
    p['att_edge1'] = s * jax.random.normal(ks[3], (heads, hid_ch), jnp.float32)
    p['w_edge1'] = s * jax.random.normal(ks[4], (3, heads * hid_ch), jnp.float32)
    p['bias1'] = s * jax.random.normal(ks[5], (heads * hid_ch,), jnp.float32)
    # conv2: GATConv(hid*heads, out, heads=1, concat=False, edge_dim=3)
    p['w2'] = s * jax.random.normal(ks[6], (heads * hid_ch, out_ch), jnp.float32)
    p['att_src2'] = s * jax.random.normal(ks[7], (1, out_ch), jnp.float32)
    p['att_dst2'] = s * jax.random.normal(ks[8], (1, out_ch), jnp.float32)
    p['att_edge2'] = s * jax.random.normal(ks[9], (1, out_ch), jnp.float32)
    p['w_edge2'] = s * jax.random.normal(ks[10], (3, out_ch), jnp.float32)
    p['bias2'] = s * jax.random.normal(ks[11], (out_ch,), jnp.float32)
    return p


def gat_forward(params, x, edge_index, edge_feat, *, hid_ch, out_ch, heads):
    n, in_ch = x.shape
    vmem_limit, tile_budget = _vmem_budget()

    n_lane = pad_up(n, 128)                         # lane axis of ealpha / h rows
    tile1 = pick_tile_dst(n_lane, heads, tile_budget)
    tile2 = pick_tile_dst(n_lane, 1, tile_budget)
    n_dst = pad_up(n_lane, max(tile1, tile2))       # dst axis padded to tiles

    hc1 = heads * hid_ch
    fcat1 = pad_up(hc1 + 2 * heads, 128)
    out_pad1 = pad_up(hc1, 128)
    wcat1, b_edge1, bias1_pad = derive_layer_mats(
        params['w1'], params['att_src1'], params['att_dst1'],
        params['att_edge1'], params['w_edge1'], params['bias1'],
        heads, hid_ch, fcat1, out_pad1)

    # Layer 2 consumes the lane-padded y1 [n_dst, out_pad1]; pad W2 rows with
    # zeros so the padded feature columns contribute nothing.
    w2p = jnp.pad(params['w2'], ((0, out_pad1 - hc1), (0, 0)))
    fcat2 = pad_up(out_ch + 2, 128)
    out_pad2 = pad_up(out_ch, 128)
    wcat2, b_edge2, bias2_pad = derive_layer_mats(
        w2p, params['att_src2'], params['att_dst2'],
        params['att_edge2'], params['w_edge2'], params['bias2'],
        1, out_ch, fcat2, out_pad2)

    src, dst, mean_attr = build_edge_struct(edge_index, edge_feat, n)

    x_pad = jnp.zeros((n_dst, in_ch), jnp.bfloat16).at[:n].set(
        x.astype(jnp.bfloat16))

    # ---- Layer 1 (dropout p=0.2 is identity in eval mode) -------------------
    hcat1 = project(x_pad, wcat1, apply_elu=False, vmem_limit=vmem_limit)
    h1 = hcat1[:n_lane, :hc1].astype(jnp.bfloat16)            # [N_lane, H*C]
    asrc1 = hcat1[:n_lane, hc1:hc1 + heads].T                 # [H, N_lane]
    adst1 = hcat1[:, hc1 + heads:hc1 + 2 * heads].T           # [H, N_dst]
    ealpha1 = build_ealpha(src, dst, mean_attr, edge_feat, n, n_dst, n_lane,
                           b_edge1)
    y1 = gat_attention(ealpha1, adst1, h1, asrc1, bias1_pad,
                       heads=heads, per_head=hid_ch, concat=True,
                       out_pad=out_pad1, tile_dst=tile1,
                       vmem_limit=vmem_limit)                 # [N_dst, out_pad1]
    del ealpha1, hcat1      # free layer-1 dense edge tensor before layer 2's

    # ---- Layer 2 (ELU fused into the projection; dropout identity) ----------
    hcat2 = project(y1, wcat2, apply_elu=True, vmem_limit=vmem_limit)
    h2 = hcat2[:n_lane, :out_ch].astype(jnp.bfloat16)
    asrc2 = hcat2[:n_lane, out_ch:out_ch + 1].T               # [1, N_lane]
    adst2 = hcat2[:, out_ch + 1:out_ch + 2].T                 # [1, N_dst]
    ealpha2 = build_ealpha(src, dst, mean_attr, edge_feat, n, n_dst, n_lane,
                           b_edge2)
    y2 = gat_attention(ealpha2, adst2, h2, asrc2, bias2_pad,
                       heads=1, per_head=out_ch, concat=False,
                       out_pad=out_pad2, tile_dst=tile2,
                       vmem_limit=vmem_limit)                 # [N_dst, out_pad2]

    return y2[:n, :out_ch]


# ---------------------------------------------------------------------------
if __name__ == "__main__":
    N, IN_CH, HID_CH, OUT_CH, HEADS = 16, 8, 16, 8, 4

    key = jax.random.PRNGKey(0)
    k_x, k_e, k_p = jax.random.split(key, 3)

    x = jax.random.normal(k_x, (N, IN_CH), jnp.float32)

    # Deterministic simple graph: edges i -> (i+k) % N for k = 1, 2, 3
    # (no self-loops, no duplicates).
    srcs, dsts = [], []
    for k in (1, 2, 3):
        for i in range(N):
            srcs.append(i)
            dsts.append((i + k) % N)
    edge_index = jnp.array([srcs, dsts], dtype=jnp.int32)          # [2, E]
    E = edge_index.shape[1]
    edge_feat = jax.random.normal(k_e, (E, 3), jnp.float32)        # [E, 3]

    params = init_gat_params(k_p, IN_CH, HID_CH, OUT_CH, HEADS)

    out = gat_forward(params, x, edge_index, edge_feat,
                      hid_ch=HID_CH, out_ch=OUT_CH, heads=HEADS)
    out = jax.block_until_ready(out)

    assert out.shape == (N, OUT_CH), out.shape
    # Guards the padding invariant: masked (-1e30) columns must underflow to
    # exactly 0 so padded-row garbage cannot leak NaN/Inf into valid rows.
    assert bool(jnp.all(jnp.isfinite(out)))
    print("KERNEL_OK")
</pallas_src>

<mosaic_0001>
module attributes {stable_mosaic.version = 11 : i64} {
  func.func @project_kernel(%arg0: i32, %arg1: memref<128x8xbf16, #tpu.memory_space<vmem>>, %arg2: memref<8x128xbf16, #tpu.memory_space<vmem>>, %arg3: memref<128x128xf32, #tpu.memory_space<vmem>>) attributes {dimension_semantics = [#tpu.dimension_semantics<parallel>], iteration_bounds = array<i64: 1>, scalar_prefetch = 0 : i64, scratch_operands = 0 : i64, tpu.core_type = #tpu.core_type<tc>, window_params = [{transform_indices = @transform_0, window_bounds = array<i64: 128, 8>}, {pipeline_mode = #tpu.pipeline_mode<synchronous>, transform_indices = @transform_1, window_bounds = array<i64: 8, 128>}, {transform_indices = @transform_2, window_bounds = array<i64: 128, 128>}]} {
    %c0 = arith.constant 0 : index
    %c0_0 = arith.constant 0 : index
    %0 = vector.load %arg1[%c0, %c0_0] : memref<128x8xbf16, #tpu.memory_space<vmem>>, vector<128x8xbf16>
    %c0_1 = arith.constant 0 : index
    %c0_2 = arith.constant 0 : index
    %1 = vector.load %arg2[%c0_1, %c0_2] : memref<8x128xbf16, #tpu.memory_space<vmem>>, vector<8x128xbf16>
    %cst = arith.constant dense<0.000000e+00> : vector<128x128xf32>
    %2 = tpu.matmul %0, %1, %cst {dimension_numbers = #tpu.dot_dimension_numbers<[1], [0], [0], [1], [0, 0, 1, 1], [], []>} : vector<128x8xbf16>, vector<8x128xbf16>, vector<128x128xf32> -> vector<128x128xf32>
    %c0_3 = arith.constant 0 : index
    %c0_4 = arith.constant 0 : index
    %3 = vector.load %arg3[%c0_3, %c0_4] : memref<128x128xf32, #tpu.memory_space<vmem>>, vector<128x128xf32>
    tpu.vector_store %arg3[%c0_3, %c0_4], %2 {strides = array<i32>} : memref<128x128xf32, #tpu.memory_space<vmem>>, vector<128x128xf32>,
    return
  }
  func.func @transform_0(%arg0: i32) -> (i32, i32) {
    %c0_i32 = arith.constant 0 : i32
    %c0_i32_0 = arith.constant 0 : i32
    return %arg0, %c0_i32 : i32, i32
  }
  func.func @transform_1(%arg0: i32) -> (i32, i32) {
    %c0_i32 = arith.constant 0 : i32
    %c0_i32_0 = arith.constant 0 : i32
    %c0_i32_1 = arith.constant 0 : i32
    return %c0_i32, %c0_i32_0 : i32, i32
  }
  func.func @transform_2(%arg0: i32) -> (i32, i32) {
    %c0_i32 = arith.constant 0 : i32
    %c0_i32_0 = arith.constant 0 : i32
    return %arg0, %c0_i32 : i32, i32
  }
}

</mosaic_0001>

<llo_original>
// kernel: tpu_custom_call.1
$region0: #{tpu_custom_call.1}
  #allocation0 [shape = 'u32[]', space=smem, size = 0x4, offset = 0x4, fixed_abs, tag = 'smem constant byte address 0x4 - core index']
  #allocation1 [shape = 'u32[144,128]{1,0:T(1,128)}', space=vmem, size = 0x12000, scoped, tag = 'internal scratch']
  %s0 = inlined_call_operand.vmem [shape: bf16[128,8], index: 0, kind: input, shape index: {}]
  %s1 = inlined_call_operand.vmem [shape: bf16[8,128], index: 1, kind: input, shape index: {}]
  %s2 = inlined_call_operand.hbm [shape: f32[128,128], index: 2, kind: output, shape index: {}]
  %s3 = sld [smem:[#allocation0]]
  $region18: #{tpu_custom_call.1} parent=0
    _
  %s5 = ssub.s32 1, %s3
  %s6 = scalar_select 0, %s5, %s3
  $region1: #{tpu_custom_call.1} parent=0
    #allocation2 [shape = 'u8[65536]{0}', space=vmem, size = 0x10000, scoped, tag = 'output window, operand 0, single buffered']
    #allocation3 [shape = 's32[1]{0}', space=sflag, size = 0x4, scoped, tag = 'scoped memory for tpu_custom_call.1']
    %7 = vsyncpa [#allocation3], 0
    // Predicated region
    $region2: #{tpu_custom_call.1} parent=1 // pred_check
      _
    $region3: #{tpu_custom_call.1} parent=1 // pred_check_branch
      %9 = sbr.rel (0) target = $region5
    $region4: #{tpu_custom_call.1} parent=1 // pred_region
      _
    $region5: #{tpu_custom_call.1} parent=1 // pred_fallthru
      _
    // Predicated region
    $region6: #{tpu_custom_call.1} parent=1 // pred_check
      _
    $region7: #{tpu_custom_call.1} parent=1 // pred_check_branch
      %11 = sbr.rel (0) target = $region9
    $region8: #{tpu_custom_call.1} parent=1 // pred_region
      _
    $region9: #{tpu_custom_call.1} parent=1 // pred_fallthru
      _
    %v13 = vld [vmem:[%s0] sm:$0xf]
    %v14 = vld [vmem:[%s0 + $0x4] sm:$0xf]
    %v15 = vld [vmem:[%s0 + $0x8] sm:$0xf]
    %v16 = vld [vmem:[%s0 + $0xc] sm:$0xf]
    %v17 = vld [vmem:[%s0 + $0x10] sm:$0xf]
    %v18 = vld [vmem:[%s0 + $0x14] sm:$0xf]
    %v19 = vld [vmem:[%s0 + $0x18] sm:$0xf]
    %v20 = vld [vmem:[%s0 + $0x1c] sm:$0xf]
    %v21 = vld [vmem:[%s0 + $0x20] sm:$0xf]
    %v22 = vld [vmem:[%s0 + $0x24] sm:$0xf]
    %v23 = vld [vmem:[%s0 + $0x28] sm:$0xf]
    %v24 = vld [vmem:[%s0 + $0x2c] sm:$0xf]
    %v25 = vld [vmem:[%s0 + $0x30] sm:$0xf]
    %v26 = vld [vmem:[%s0 + $0x34] sm:$0xf]
    %v27 = vld [vmem:[%s0 + $0x38] sm:$0xf]
    %v28 = vld [vmem:[%s0 + $0x3c] sm:$0xf]
    %v29 = vld [vmem:[%s1] sm:$0xf]
    %v46 = vunpack.c.l.b16 %v13
    %v47 = vunpack.c.l.b16 %v14
    %v48 = vunpack.c.l.b16 %v15
    %v49 = vunpack.c.l.b16 %v16
    %v50 = vunpack.c.l.b16 %v17
    %v51 = vunpack.c.l.b16 %v18
    %v52 = vunpack.c.l.b16 %v19
    %v53 = vunpack.c.l.b16 %v20
    %v54 = vunpack.c.l.b16 %v21
    %v55 = vunpack.c.l.b16 %v22
    %v56 = vunpack.c.l.b16 %v23
    %v57 = vunpack.c.l.b16 %v24
    %v58 = vunpack.c.l.b16 %v25
    %v59 = vunpack.c.l.b16 %v26
    %v60 = vunpack.c.l.b16 %v27
    %v61 = vunpack.c.l.b16 %v28
    %v62 = vpack.c.b16 %v47, %v46
    %v63 = vpack.c.b16 %v49, %v48
    %v64 = vpack.c.b16 %v51, %v50
    %v65 = vpack.c.b16 %v53, %v52
    %v66 = vpack.c.b16 %v55, %v54
    %v67 = vpack.c.b16 %v57, %v56
    %v68 = vpack.c.b16 %v59, %v58
    %v69 = vpack.c.b16 %v61, %v60
    %vm70 = vcmask 64512
    %v72 = vsel %vm70, %v62, 0
    %v75 = vsel %vm70, %v63, 0
    %v78 = vsel %vm70, %v64, 0
    %v81 = vsel %vm70, %v65, 0
    %v84 = vsel %vm70, %v66, 0
    %v87 = vsel %vm70, %v67, 0
    %v90 = vsel %vm70, %v68, 0
    %v93 = vsel %vm70, %v69, 0
    %vm95 = vcmask 1043456
    %v97 = vsel %vm95, %v29, 0
    %99 = vmatprep.subr.bf16.mxu0 0
    %100 = vmatpush1.bf16.msra.mxu0 %v97
    %101 = vmatprep.subr.bf16.mxu0 0
    %102 = vmatpush1.bf16.msra.mxu0 0
    %103 = vmatprep.subr.bf16.mxu0 0
    %104 = vmatpush1.bf16.msra.mxu0 0
    %105 = vmatprep.subr.bf16.mxu0 0
    %106 = vmatpush1.bf16.msra.mxu0 0
    %107 = vmatprep.subr.bf16.mxu0 0
    %108 = vmatpush1.bf16.msra.mxu0 0
    %109 = vmatprep.subr.bf16.mxu0 0
    %110 = vmatpush1.bf16.msra.mxu0 0
    %111 = vmatprep.subr.bf16.mxu0 0
    %112 = vmatpush1.bf16.msra.mxu0 0
    %113 = vmatprep.subr.bf16.mxu0 0
    %114 = vmatpush1.bf16.msra.mxu0 0
    %115 = vmatprep.subr.bf16.mxu0 0
    %116 = vmatpush1.bf16.msra.mxu0 0
    %117 = vmatprep.subr.bf16.mxu0 0
    %118 = vmatpush1.bf16.msra.mxu0 0
    %119 = vmatprep.subr.bf16.mxu0 0
    %120 = vmatpush1.bf16.msra.mxu0 0
    %121 = vmatprep.subr.bf16.mxu0 0
    %122 = vmatpush1.bf16.msra.mxu0 0
    %123 = vmatprep.subr.bf16.mxu0 0
    %124 = vmatpush1.bf16.msra.mxu0 0
    %125 = vmatprep.subr.bf16.mxu0 0
    %126 = vmatpush1.bf16.msra.mxu0 0
    %127 = vmatprep.subr.bf16.mxu0 0
    %128 = vmatpush1.bf16.msra.mxu0 0
    %129 = vmatprep.subr.bf16.mxu0 0
    %130 = vmatpush1.bf16.msra.mxu0 0
    %131 = vmatprep.mubr.bf16.mxu0 0
    %132 = vmatmul.mubr.bf16.gmra.mrb[0].mxu0 %v72
    %v133 = vpop.f32.mrb[0].mxu0
    %v134 = vadd.f32 0.0, %v133
    %v135 = vpop.f32.mrb[0].mxu0
    %v136 = vpop.f32.mrb[0].mxu0
    %v137 = vadd.f32 0.0, %v136
    %v138 = vpop.f32.mrb[0].mxu0
    %139 = vmatprep.mubr.bf16.mxu0 0
    %140 = vmatmul.mubr.bf16.gmra.mrb[0].mxu0 %v75
    %v141 = vpop.f32.mrb[0].mxu0
    %v142 = vadd.f32 0.0, %v141
    %v143 = vpop.f32.mrb[0].mxu0
    %v144 = vpop.f32.mrb[0].mxu0
    %v145 = vadd.f32 0.0, %v144
    %v146 = vpop.f32.mrb[0].mxu0
    %147 = vmatprep.mubr.bf16.mxu0 0
    %148 = vmatmul.mubr.bf16.gmra.mrb[0].mxu0 %v78
    %v149 = vpop.f32.mrb[0].mxu0
    %v150 = vadd.f32 0.0, %v149
    %v151 = vpop.f32.mrb[0].mxu0
    %v152 = vpop.f32.mrb[0].mxu0
    %v153 = vadd.f32 0.0, %v152
    %v154 = vpop.f32.mrb[0].mxu0
    %155 = vmatprep.mubr.bf16.mxu0 0
    %156 = vmatmul.mubr.bf16.gmra.mrb[0].mxu0 %v81
    %v157 = vpop.f32.mrb[0].mxu0
    %v158 = vadd.f32 0.0, %v157
    %v159 = vpop.f32.mrb[0].mxu0
    %v160 = vpop.f32.mrb[0].mxu0
    %v161 = vadd.f32 0.0, %v160
    %v162 = vpop.f32.mrb[0].mxu0
    %163 = vmatprep.mubr.bf16.mxu0 0
    %164 = vmatmul.mubr.bf16.gmra.mrb[0].mxu0 %v84
    %v165 = vpop.f32.mrb[0].mxu0
    %v166 = vadd.f32 0.0, %v165
    %v167 = vpop.f32.mrb[0].mxu0
    %v168 = vpop.f32.mrb[0].mxu0
    %v169 = vadd.f32 0.0, %v168
    %v170 = vpop.f32.mrb[0].mxu0
    %171 = vmatprep.mubr.bf16.mxu0 0
    %172 = vmatmul.mubr.bf16.gmra.mrb[0].mxu0 %v87
    %v173 = vpop.f32.mrb[0].mxu0
    %v174 = vadd.f32 0.0, %v173
    %v175 = vpop.f32.mrb[0].mxu0
    %v176 = vpop.f32.mrb[0].mxu0
    %v177 = vadd.f32 0.0, %v176
    %v178 = vpop.f32.mrb[0].mxu0
    %179 = vmatprep.mubr.bf16.mxu0 0
    %180 = vmatmul.mubr.bf16.gmra.mrb[0].mxu0 %v90
    %v181 = vpop.f32.mrb[0].mxu0
    %v182 = vadd.f32 0.0, %v181
    %v183 = vpop.f32.mrb[0].mxu0
    %v184 = vpop.f32.mrb[0].mxu0
    %v185 = vadd.f32 0.0, %v184
    %v186 = vpop.f32.mrb[0].mxu0
    %187 = vmatprep.mubr.bf16.mxu0 0
    %188 = vmatmul.mubr.bf16.gmra.mrb[0].mxu0 %v93
    %v189 = vpop.f32.mrb[0].mxu0
    %v190 = vadd.f32 0.0, %v189
    %v191 = vpop.f32.mrb[0].mxu0
    %v192 = vpop.f32.mrb[0].mxu0
    %v193 = vadd.f32 0.0, %v192
    %v194 = vpop.f32.mrb[0].mxu0
    %195 = vdwg.mxu0
    %196 = vst [vmem:[#allocation2] sm:$0xff] %v134
    %197 = vst [vmem:[#allocation2 + $0x8] sm:$0xff] %v137
    %198 = vst [vmem:[#allocation2 + $0x10] sm:$0xff] %v142
    %199 = vst [vmem:[#allocation2 + $0x18] sm:$0xff] %v145
    %200 = vst [vmem:[#allocation2 + $0x20] sm:$0xff] %v150
    %201 = vst [vmem:[#allocation2 + $0x28] sm:$0xff] %v153
    %202 = vst [vmem:[#allocation2 + $0x30] sm:$0xff] %v158
    %203 = vst [vmem:[#allocation2 + $0x38] sm:$0xff] %v161
    %204 = vst [vmem:[#allocation2 + $0x40] sm:$0xff] %v166
    %205 = vst [vmem:[#allocation2 + $0x48] sm:$0xff] %v169
    %206 = vst [vmem:[#allocation2 + $0x50] sm:$0xff] %v174
    %207 = vst [vmem:[#allocation2 + $0x58] sm:$0xff] %v177
    %208 = vst [vmem:[#allocation2 + $0x60] sm:$0xff] %v182
    %209 = vst [vmem:[#allocation2 + $0x68] sm:$0xff] %v185
    %210 = vst [vmem:[#allocation2 + $0x70] sm:$0xff] %v190
    %211 = vst [vmem:[#allocation2 + $0x78] sm:$0xff] %v193
    // Predicated region
    $region10: #{tpu_custom_call.1} parent=1 // pred_check
      _
    $region11: #{tpu_custom_call.1} parent=1 // pred_check_branch
      %213 = sbr.rel (0) target = $region13
    $region12: #{tpu_custom_call.1} parent=1 // pred_region
      %s215 = ssub.s32 2048, 2048
      %216 = vsyncadd [#allocation3], %s215
      %s217 = sshll.u32 [#allocation2], 4
      %s218 = int_to_ptr.vmem [resolvable:$true] %s217
      %223 = dma.vmem_to_hbm [thread:$0]  %s218, 2048, %s2, [#allocation3], 128, 128, 8
    $region13: #{tpu_custom_call.1} parent=1 // pred_fallthru
      _
    // Predicated region
    $region14: #{tpu_custom_call.1} parent=1 // pred_check
      _
    $region15: #{tpu_custom_call.1} parent=1 // pred_check_branch
      %225 = sbr.rel (0) target = $region17
    $region16: #{tpu_custom_call.1} parent=1 // pred_region
      %226 = dma.done [#allocation3], 2048
    $region17: #{tpu_custom_call.1} parent=1 // pred_fallthru
      _
    %227 = vsyncpa [#allocation3], 1

</llo_original>
